<compile_context>
chip_gen: v7x
topology: tpu7x:2x2x1
jax: 0.10.0
libtpu: 0.0.40
codegen_flags: <defaults>
</compile_context>

<pallas_src>
import functools

import jax
import jax.numpy as jnp
from jax.experimental import pallas as pl
from jax.experimental.pallas import tpu as pltpu


@functools.lru_cache(maxsize=None)
def _roll_mode() -> str:
    """Detects pltpu.roll's rotation direction once, outside any jit trace.

    Returns:
      "fwd": pltpu.roll(x, s, axis) == jnp.roll(x, s, axis)
      "bwd": pltpu.roll rotates towards lower indices
      "jnp": pltpu.roll unavailable in this execution mode -> use jnp.roll in-kernel
    """
    def probe(x_ref, o_ref):
        o_ref[...] = pltpu.roll(x_ref[...], 1, axis=1)

    try:
        with jax.ensure_compile_time_eval():
            x = jnp.arange(8 * 128, dtype=jnp.float32).reshape(8, 128)
            y = pl.pallas_call(
                probe, out_shape=jax.ShapeDtypeStruct((8, 128), jnp.float32)
            )(x)
            fwd = bool(jnp.allclose(y, jnp.roll(x, 1, axis=1)))
        return "fwd" if fwd else "bwd"
    except Exception:
        return "jnp"


def _relu_dwconv_kernel(m_ref, x_ref, w_ref, o_ref, *, W, roll_mode):
    # m_ref: (4, L)     row 0: 1 where image column != 0
    #                   row 1: 1 where image column != W-1
    #                   row 2: 1 where output row != 0
    #                   row 3: 1 where output row != H-1
    # x_ref: (1, CB, L) flattened (channel, h*W + w) slab of the input
    # w_ref: (CB, 9)    per-channel taps, k = (dy+1)*3 + (dx+1)
    # o_ref: (1, CB, L)
    L = x_ref.shape[-1]

    def shift(v, s):
        # shift(v, s)[p] == v[(p - s) mod L]   (jnp.roll(v, s) semantics)
        if roll_mode == "jnp":
            return jnp.roll(v, s, axis=1)
        amt = (s if roll_mode == "fwd" else -s) % L
        return pltpu.roll(v, amt, axis=1)

    x = jnp.maximum(x_ref[0], 0.0)          # ReLU once; shared by all 9 taps
    wts = w_ref[...]                        # (CB, 9), hoisted

    m_not_col0 = m_ref[0:1, :]
    m_not_colW = m_ref[1:2, :]
    m_not_row0 = m_ref[2:3, :]
    m_not_rowH = m_ref[3:4, :]

    # Two horizontal shifts, shared across the three kernel rows (was 6 rolls).
    h_m1 = shift(x * m_not_colW, 1)         # src[p-1]; out-of-image column -> 0
    h_p1 = shift(x * m_not_col0, -1)        # src[p+1]; out-of-image column -> 0

    def row_sum(dy):
        b = (dy + 1) * 3
        return (h_m1 * wts[:, b:b + 1]
                + x * wts[:, b + 1:b + 2]
                + h_p1 * wts[:, b + 2:b + 3])

    mid = row_sum(0)
    top = shift(row_sum(-1), W) * m_not_row0   # out[p] += inner[p - W]  (rows >= 1)
    bot = shift(row_sum(1), -W) * m_not_rowH   # out[p] += inner[p + W]  (rows <= H-2)
    o_ref[0] = (mid + top + bot).astype(o_ref.dtype)


def _build_masks(H, W, dtype):
    L = H * W
    lane = jnp.arange(L, dtype=jnp.int32)
    col = lane % W
    return jnp.stack(
        [
            (col != 0).astype(dtype),
            (col != W - 1).astype(dtype),
            (lane >= W).astype(dtype),
            (lane < (H - 1) * W).astype(dtype),
        ],
        axis=0,
    )  # (4, L)


@functools.partial(jax.jit, static_argnames=("roll_mode",))
def _relu_dwconv3x3_impl(x_nchw, weight_oihw, roll_mode):
    N, C, H, W = x_nchw.shape
    L = H * W
    assert weight_oihw.shape == (C, 1, 3, 3)
    assert C % 8 == 0, "depthwise channel count must be a multiple of 8"

    # Channels per grid step: the full channel extent, unless that would leave a
    # single grid step (N == 1) -- then split in two so both v7x TensorCores get
    # one of the independent "parallel" steps.
    CB = C
    if N == 1 and C % 16 == 0:
        CB = C // 2
    n_cblk = C // CB

    x3 = x_nchw.reshape(N, C, L)            # free reshape; no pad / slice round trip
    w2 = weight_oihw.reshape(C, 9)
    masks = _build_masks(H, W, x_nchw.dtype)

    kernel = functools.partial(_relu_dwconv_kernel, W=W, roll_mode=roll_mode)

    out3 = pl.pallas_call(
        kernel,
        out_shape=jax.ShapeDtypeStruct((N, C, L), x_nchw.dtype),
        grid_spec=pltpu.PrefetchScalarGridSpec(
            num_scalar_prefetch=0,
            grid=(n_cblk, N),               # batch innermost: weights/masks stay resident
            in_specs=[
                pl.BlockSpec((4, L), lambda c, n: (0, 0)),         # masks (resident)
                pl.BlockSpec((1, CB, L), lambda c, n: (n, c, 0)),  # input slab
                pl.BlockSpec((CB, 9), lambda c, n: (c, 0)),        # per-channel taps
            ],
            out_specs=pl.BlockSpec((1, CB, L), lambda c, n: (n, c, 0)),
        ),
        compiler_params=pltpu.CompilerParams(
            dimension_semantics=("parallel", "parallel"),
        ),
    )(masks, x3, w2)

    return out3.reshape(N, C, H, W)


def relu_dwconv3x3(x_nchw, weight_oihw):
    """y = depthwise_conv3x3(relu(x)); x: (N, C, H, W), weight: (C, 1, 3, 3)."""
    return _relu_dwconv3x3_impl(x_nchw, weight_oihw, _roll_mode())


def _reference(x_nchw, weight_oihw):
    x = jnp.maximum(x_nchw, 0.0)
    C = x.shape[1]
    return jax.lax.conv_general_dilated(
        x, weight_oihw,
        window_strides=(1, 1), padding=((1, 1), (1, 1)),
        dimension_numbers=("NCHW", "OIHW", "NCHW"),
        feature_group_count=C,
    )


if __name__ == "__main__":
    key = jax.random.PRNGKey(0)
    k_x, k_w = jax.random.split(key)

    # Channel count is fixed at 48 by Conv2d(48, 48, ..., groups=48); spatial dims
    # shrunk from 56x56 to 16x16 and batch set to 2 to keep the self-test small.
    N, C, H, W = 2, 48, 16, 16
    x = jax.random.normal(k_x, (N, C, H, W), dtype=jnp.float32)
    weight = 0.1 * jax.random.normal(k_w, (C, 1, 3, 3), dtype=jnp.float32)

    out = relu_dwconv3x3(x, weight)
    out = jax.block_until_ready(out)

    ref = _reference(x, weight)
    assert out.shape == (N, C, H, W)
    assert jnp.allclose(out, ref, atol=1e-5, rtol=1e-5), float(jnp.max(jnp.abs(out - ref)))

    print("KERNEL_OK")
</pallas_src>

<mosaic_0001>
module attributes {stable_mosaic.version = 11 : i64} {
  func.func @probe(%arg0: memref<8x128xf32, #tpu.memory_space<vmem>>, %arg1: memref<8x128xf32, #tpu.memory_space<vmem>>) attributes {dimension_semantics = [], scalar_prefetch = 0 : i64, scratch_operands = 0 : i64, tpu.core_type = #tpu.core_type<tc>} {
    %c0 = arith.constant 0 : index
    %c0_0 = arith.constant 0 : index
    %0 = vector.load %arg0[%c0, %c0_0] : memref<8x128xf32, #tpu.memory_space<vmem>>, vector<8x128xf32>
    %c1_i32 = arith.constant 1 : i32
    %1 = tpu.dynamic_rotate %0 by %c1_i32 dim 1 : vector<8x128xf32>, i32 -> vector<8x128xf32>
    %c0_1 = arith.constant 0 : index
    %c0_2 = arith.constant 0 : index
    %2 = vector.load %arg1[%c0_1, %c0_2] : memref<8x128xf32, #tpu.memory_space<vmem>>, vector<8x128xf32>
    tpu.vector_store %arg1[%c0_1, %c0_2], %1 {strides = array<i32>} : memref<8x128xf32, #tpu.memory_space<vmem>>, vector<8x128xf32>,
    return
  }
}

module attributes {stable_mosaic.version = 11 : i64} {
  func.func @_relu_dwconv_kernel(%arg0: i32, %arg1: i32, %arg2: memref<4x256xf32, #tpu.memory_space<vmem>>, %arg3: memref<1x48x256xf32, #tpu.memory_space<vmem>>, %arg4: memref<48x9xf32, #tpu.memory_space<vmem>>, %arg5: memref<1x48x256xf32, #tpu.memory_space<vmem>>) attributes {dimension_semantics = [#tpu.dimension_semantics<parallel>, #tpu.dimension_semantics<parallel>], iteration_bounds = array<i64: 1, 2>, scalar_prefetch = 0 : i64, scratch_operands = 0 : i64, tpu.core_type = #tpu.core_type<tc>, window_params = [{pipeline_mode = #tpu.pipeline_mode<synchronous>, transform_indices = @transform_0, window_bounds = array<i64: 4, 256>}, {transform_indices = @transform_1, window_bounds = array<i64: 1, 48, 256>}, {transform_indices = @transform_2, window_bounds = array<i64: 48, 9>}, {transform_indices = @transform_3, window_bounds = array<i64: 1, 48, 256>}]} {
    %c0 = arith.constant 0 : index
    %c0_0 = arith.constant 0 : index
    %c0_1 = arith.constant 0 : index
    %0 = vector.load %arg3[%c0, %c0_0, %c0_1] : memref<1x48x256xf32, #tpu.memory_space<vmem>>, vector<1x48x256xf32>
    %1 = vector.shape_cast %0 : vector<1x48x256xf32> to vector<48x256xf32>
    %cst = arith.constant 0.000000e+00 : f32
    %2 = vector.broadcast %cst : f32 to vector<48x256xf32>
    %3 = arith.maximumf %1, %2 : vector<48x256xf32>
    %c0_2 = arith.constant 0 : index
    %c0_3 = arith.constant 0 : index
    %4 = vector.load %arg4[%c0_2, %c0_3] : memref<48x9xf32, #tpu.memory_space<vmem>>, vector<48x9xf32>
    %c0_4 = arith.constant 0 : index
    %c0_5 = arith.constant 0 : index
    %5 = vector.load %arg2[%c0_4, %c0_5] : memref<4x256xf32, #tpu.memory_space<vmem>>, vector<1x256xf32>
    %c1 = arith.constant 1 : index
    %c0_6 = arith.constant 0 : index
    %6 = vector.load %arg2[%c1, %c0_6] : memref<4x256xf32, #tpu.memory_space<vmem>>, vector<1x256xf32>
    %c2 = arith.constant 2 : index
    %c0_7 = arith.constant 0 : index
    %7 = vector.load %arg2[%c2, %c0_7] : memref<4x256xf32, #tpu.memory_space<vmem>>, vector<1x256xf32>
    %c3 = arith.constant 3 : index
    %c0_8 = arith.constant 0 : index
    %8 = vector.load %arg2[%c3, %c0_8] : memref<4x256xf32, #tpu.memory_space<vmem>>, vector<1x256xf32>
    %9 = vector.broadcast %6 : vector<1x256xf32> to vector<48x256xf32>
    %10 = arith.mulf %3, %9 : vector<48x256xf32>
    %11 = vector.extract_strided_slice %10 {offsets = [0, 255], sizes = [48, 1], strides = [1, 1]} : vector<48x256xf32> to vector<48x1xf32>
    %12 = vector.extract_strided_slice %10 {offsets = [0, 0], sizes = [48, 255], strides = [1, 1]} : vector<48x256xf32> to vector<48x255xf32>
    %13 = tpu.concatenate %11, %12 in 1 : vector<48x1xf32>, vector<48x255xf32> -> vector<48x256xf32>
    %14 = vector.broadcast %5 : vector<1x256xf32> to vector<48x256xf32>
    %15 = arith.mulf %3, %14 : vector<48x256xf32>
    %16 = vector.extract_strided_slice %15 {offsets = [0, 1], sizes = [48, 255], strides = [1, 1]} : vector<48x256xf32> to vector<48x255xf32>
    %17 = vector.extract_strided_slice %15 {offsets = [0, 0], sizes = [48, 1], strides = [1, 1]} : vector<48x256xf32> to vector<48x1xf32>
    %18 = tpu.concatenate %16, %17 in 1 : vector<48x255xf32>, vector<48x1xf32> -> vector<48x256xf32>
    %19 = vector.extract_strided_slice %4 {offsets = [0, 3], sizes = [48, 1], strides = [1, 1]} : vector<48x9xf32> to vector<48x1xf32>
    %20 = vector.broadcast %19 : vector<48x1xf32> to vector<48x256xf32>
    %21 = arith.mulf %13, %20 : vector<48x256xf32>
    %22 = vector.extract_strided_slice %4 {offsets = [0, 4], sizes = [48, 1], strides = [1, 1]} : vector<48x9xf32> to vector<48x1xf32>
    %23 = vector.broadcast %22 : vector<48x1xf32> to vector<48x256xf32>
    %24 = arith.mulf %3, %23 : vector<48x256xf32>
    %25 = arith.addf %21, %24 : vector<48x256xf32>
    %26 = vector.extract_strided_slice %4 {offsets = [0, 5], sizes = [48, 1], strides = [1, 1]} : vector<48x9xf32> to vector<48x1xf32>
    %27 = vector.broadcast %26 : vector<48x1xf32> to vector<48x256xf32>
    %28 = arith.mulf %18, %27 : vector<48x256xf32>
    %29 = arith.addf %25, %28 : vector<48x256xf32>
    %30 = vector.extract_strided_slice %4 {offsets = [0, 0], sizes = [48, 1], strides = [1, 1]} : vector<48x9xf32> to vector<48x1xf32>
    %31 = vector.broadcast %30 : vector<48x1xf32> to vector<48x256xf32>
    %32 = arith.mulf %13, %31 : vector<48x256xf32>
    %33 = vector.extract_strided_slice %4 {offsets = [0, 1], sizes = [48, 1], strides = [1, 1]} : vector<48x9xf32> to vector<48x1xf32>
    %34 = vector.broadcast %33 : vector<48x1xf32> to vector<48x256xf32>
    %35 = arith.mulf %3, %34 : vector<48x256xf32>
    %36 = arith.addf %32, %35 : vector<48x256xf32>
    %37 = vector.extract_strided_slice %4 {offsets = [0, 2], sizes = [48, 1], strides = [1, 1]} : vector<48x9xf32> to vector<48x1xf32>
    %38 = vector.broadcast %37 : vector<48x1xf32> to vector<48x256xf32>
    %39 = arith.mulf %18, %38 : vector<48x256xf32>
    %40 = arith.addf %36, %39 : vector<48x256xf32>
    %41 = vector.extract_strided_slice %40 {offsets = [0, 240], sizes = [48, 16], strides = [1, 1]} : vector<48x256xf32> to vector<48x16xf32>
    %42 = vector.extract_strided_slice %40 {offsets = [0, 0], sizes = [48, 240], strides = [1, 1]} : vector<48x256xf32> to vector<48x240xf32>
    %43 = tpu.concatenate %41, %42 in 1 : vector<48x16xf32>, vector<48x240xf32> -> vector<48x256xf32>
    %44 = vector.broadcast %7 : vector<1x256xf32> to vector<48x256xf32>
    %45 = arith.mulf %43, %44 : vector<48x256xf32>
    %46 = vector.extract_strided_slice %4 {offsets = [0, 6], sizes = [48, 1], strides = [1, 1]} : vector<48x9xf32> to vector<48x1xf32>
    %47 = vector.broadcast %46 : vector<48x1xf32> to vector<48x256xf32>
    %48 = arith.mulf %13, %47 : vector<48x256xf32>
    %49 = vector.extract_strided_slice %4 {offsets = [0, 7], sizes = [48, 1], strides = [1, 1]} : vector<48x9xf32> to vector<48x1xf32>
    %50 = vector.broadcast %49 : vector<48x1xf32> to vector<48x256xf32>
    %51 = arith.mulf %3, %50 : vector<48x256xf32>
    %52 = arith.addf %48, %51 : vector<48x256xf32>
    %53 = vector.extract_strided_slice %4 {offsets = [0, 8], sizes = [48, 1], strides = [1, 1]} : vector<48x9xf32> to vector<48x1xf32>
    %54 = vector.broadcast %53 : vector<48x1xf32> to vector<48x256xf32>
    %55 = arith.mulf %18, %54 : vector<48x256xf32>
    %56 = arith.addf %52, %55 : vector<48x256xf32>
    %57 = vector.extract_strided_slice %56 {offsets = [0, 16], sizes = [48, 240], strides = [1, 1]} : vector<48x256xf32> to vector<48x240xf32>
    %58 = vector.extract_strided_slice %56 {offsets = [0, 0], sizes = [48, 16], strides = [1, 1]} : vector<48x256xf32> to vector<48x16xf32>
    %59 = tpu.concatenate %57, %58 in 1 : vector<48x240xf32>, vector<48x16xf32> -> vector<48x256xf32>
    %60 = vector.broadcast %8 : vector<1x256xf32> to vector<48x256xf32>
    %61 = arith.mulf %59, %60 : vector<48x256xf32>
    %62 = arith.addf %29, %45 : vector<48x256xf32>
    %63 = arith.addf %62, %61 : vector<48x256xf32>
    %c0_9 = arith.constant 0 : index
    %c0_10 = arith.constant 0 : index
    %c0_11 = arith.constant 0 : index
    %64 = vector.load %arg5[%c0_9, %c0_10, %c0_11] : memref<1x48x256xf32, #tpu.memory_space<vmem>>, vector<1x48x256xf32>
    %65 = vector.shape_cast %64 : vector<1x48x256xf32> to vector<48x256xf32>
    %66 = vector.shape_cast %63 : vector<48x256xf32> to vector<1x48x256xf32>
    tpu.vector_store %arg5[%c0_9, %c0_10, %c0_11], %66 {strides = array<i32>} : memref<1x48x256xf32, #tpu.memory_space<vmem>>, vector<1x48x256xf32>,
    return
  }
  func.func @transform_0(%arg0: i32, %arg1: i32) -> (i32, i32) {
    %c0_i32 = arith.constant 0 : i32
    %c0_i32_0 = arith.constant 0 : i32
    %c0_i32_1 = arith.constant 0 : i32
    return %c0_i32, %c0_i32_0 : i32, i32
  }
  func.func @transform_1(%arg0: i32, %arg1: i32) -> (i32, i32, i32) {
    %c0_i32 = arith.constant 0 : i32
    %c0_i32_0 = arith.constant 0 : i32
    return %arg1, %arg0, %c0_i32 : i32, i32, i32
  }
  func.func @transform_2(%arg0: i32, %arg1: i32) -> (i32, i32) {
    %c0_i32 = arith.constant 0 : i32
    %c0_i32_0 = arith.constant 0 : i32
    return %arg0, %c0_i32 : i32, i32
  }
  func.func @transform_3(%arg0: i32, %arg1: i32) -> (i32, i32, i32) {
    %c0_i32 = arith.constant 0 : i32
    %c0_i32_0 = arith.constant 0 : i32
    return %arg1, %arg0, %c0_i32 : i32, i32, i32
  }
}

</mosaic_0001>

<llo_original>
// kernel: tpu_custom_call.1
$region0: #{tpu_custom_call.1}
  #allocation0 [shape = 'u32[]', space=smem, size = 0x4, offset = 0x4, fixed_abs, tag = 'smem constant byte address 0x4 - core index']
  #allocation1 [shape = 'u32[144,128]{1,0:T(1,128)}', space=vmem, size = 0x12000, scoped, tag = 'internal scratch']
  %s0 = inlined_call_operand.hbm [shape: f32[8,128], index: 0, kind: input, shape index: {}]
  %s1 = inlined_call_operand.hbm [shape: f32[8,128], index: 1, kind: output, shape index: {}]
  %s2 = sld [smem:[#allocation0]]
  $region18: #{tpu_custom_call.1} parent=0
    _
  %s4 = ssub.s32 1, %s2
  %s5 = scalar_select 0, %s4, %s2
  $region1: #{tpu_custom_call.1} parent=0
    #allocation2 [shape = 'u8[4096]{0}', space=vmem, size = 0x1000, scoped, tag = 'input window, operand 0, single buffered']
    #allocation3 [shape = 's32[1]{0}', space=sflag, size = 0x4, scoped, tag = 'scoped memory for tpu_custom_call.1']
    #allocation4 [shape = 's32[1]{0}', space=sflag, size = 0x4, scoped, tag = 'scoped memory for tpu_custom_call.1']
    #allocation5 [shape = 'u8[4096]{0}', space=vmem, size = 0x1000, scoped, tag = 'output window, operand 0, single buffered']
    %6 = vsyncpa [#allocation3], 0
    %7 = vsyncpa [#allocation4], 0
    // Predicated region
    $region2: #{tpu_custom_call.1} parent=1 // pred_check
      _
    $region3: #{tpu_custom_call.1} parent=1 // pred_check_branch
      %9 = sbr.rel (0) target = $region5
    $region4: #{tpu_custom_call.1} parent=1 // pred_region
      %s11 = ssub.s32 128, 128
      %12 = vsyncadd [#allocation3], %s11
      %s14 = sshll.u32 [#allocation2], 4
      %s15 = int_to_ptr.vmem [resolvable:$true] %s14
      %17 = dma.hbm_to_vmem [thread:$0]  %s0, 128, %s15, [#allocation3]
    $region5: #{tpu_custom_call.1} parent=1 // pred_fallthru
      _
    // Predicated region
    $region6: #{tpu_custom_call.1} parent=1 // pred_check
      _
    $region7: #{tpu_custom_call.1} parent=1 // pred_check_branch
      %19 = sbr.rel (0) target = $region9
    $region8: #{tpu_custom_call.1} parent=1 // pred_region
      %20 = dma.done [#allocation3], 128
    $region9: #{tpu_custom_call.1} parent=1 // pred_fallthru
      _
    %v21 = vld [vmem:[#allocation2] sm:$0xff]
    %22 = vrot.lane.b32.xlu0 %v21, 1
    %v23 = vpop.permute.xlu0 %22
    %24 = vst [vmem:[#allocation5] sm:$0xff] %v23
    // Predicated region
    $region10: #{tpu_custom_call.1} parent=1 // pred_check
      _
    $region11: #{tpu_custom_call.1} parent=1 // pred_check_branch
      %26 = sbr.rel (0) target = $region13
    $region12: #{tpu_custom_call.1} parent=1 // pred_region
      %s28 = ssub.s32 128, 128
      %29 = vsyncadd [#allocation4], %s28
      %s31 = sshll.u32 [#allocation5], 4
      %s32 = int_to_ptr.vmem [resolvable:$true] %s31
      %34 = dma.vmem_to_hbm [thread:$0]  %s32, 128, %s1, [#allocation4]
    $region13: #{tpu_custom_call.1} parent=1 // pred_fallthru
      _
    // Predicated region
    $region14: #{tpu_custom_call.1} parent=1 // pred_check
      _
    $region15: #{tpu_custom_call.1} parent=1 // pred_check_branch
      %36 = sbr.rel (0) target = $region17
    $region16: #{tpu_custom_call.1} parent=1 // pred_region
      %37 = dma.done [#allocation4], 128
    $region17: #{tpu_custom_call.1} parent=1 // pred_fallthru
      _
    %38 = vsyncpa [#allocation3], 1
    %39 = vsyncpa [#allocation4], 1

// kernel: _relu_dwconv3x3_impl.1
$region0: #{_relu_dwconv3x3_impl.1}
  #allocation0 [shape = 'u32[]', space=smem, size = 0x4, offset = 0x4, fixed_abs, tag = 'smem constant byte address 0x4 - core index']
  #allocation1 [shape = 'u32[144,128]{1,0:T(1,128)}', space=vmem, size = 0x12000, scoped, tag = 'internal scratch']
  %s0 = inlined_call_operand.vmem [shape: f32[4,256], index: 0, kind: input, shape index: {}]
  %s1 = inlined_call_operand.vmem [shape: f32[2,48,256], index: 1, kind: input, shape index: {}]
  %s2 = inlined_call_operand.vmem [shape: f32[48,9], index: 2, kind: input, shape index: {}]
  %s3 = inlined_call_operand.vmem [shape: f32[2,48,256], index: 3, kind: output, shape index: {}]
  %s4 = sld [smem:[#allocation0]]
  $region45: #{_relu_dwconv3x3_impl.1} parent=0
    _
  %s6 = ssub.s32 1, %s4
  %s7 = scalar_select 0, %s6, %s4
  loop: start=0, step=1, limit=4
  $region2: #{_relu_dwconv3x3_impl.1} parent=0 // loop_pre_header
    _
  $region3: #{_relu_dwconv3x3_impl.1} parent=0 // loop_header
    %s9 = sphi 0, %s13
    %p10 = scmp.ge.s32.totalorder %s9, 4
    %s16 = sphi 0, %s28
    %s17 = sphi 0, %s24
    %s18 = sphi 0, %s16
    %s19 = sphi 0, %s17
    %s20 = sphi 0, %s18
    %s21 = sphi 0, %s19
    %s29 = sphi 0, %s29
    %s31 = sphi 0, %s29
    %s32 = sphi 0, %s31
    %s46 = sphi 0, %s32
    %s54 = sphi 0, %s56
    %s57 = sphi 0, %s54
    %s58 = sphi 0, %s57
    %s74 = sphi 0, %s58
    %s80 = sphi 0, %s82
    %s83 = sphi 0, %s80
    %s84 = sphi 0, %s83
    %s100 = sphi 0, %s84
    %s108 = sphi 0, %s110
    %s111 = sphi 0, %s108
    %s112 = sphi 0, %s111
    %s128 = sphi 0, %s112
  $region4: #{_relu_dwconv3x3_impl.1} parent=0 // loop_header_branch
    %12 = sbr.rel (%p10) target = $region8
  $region5: #{_relu_dwconv3x3_impl.1} parent=0 // loop_body
    %s14 = ssub.s32 %s9, 1
    %s15 = ssub.s32 %s9, 2
    %s22 = sadd.s32 1, %s17
    %p23 = scmp.ge.s32.totalorder %s22, 2
    %s24 = scalar_select %p23, 0, %s22
    %s25 = sadd.s32 1, %s16
    %s26 = scalar_select %p23, %s25, %s16
    %p27 = scmp.ge.s32.totalorder %s26, 1
    %s28 = scalar_select %p27, 0, %s26
    %s30 = sadd.s32 %s29, 1
    %p33 = scmp.eq.s32.totalorder %s9, 1
    %p34 = scmp.ne.s32.totalorder %s29, %s31
    %p35 = scmp.eq.s32.totalorder %s9, 0
    %p36 = por %p34, %p35
    %p37 = scmp.ne.s32.totalorder %s29, %s31
    %p38 = scmp.eq.s32.totalorder %s14, 1
    %p39 = por %p37, %p38
    %p40 = scmp.ne.s32.totalorder %s31, %s32
    %p41 = scmp.eq.s32.totalorder %s14, 0
    %p42 = por %p40, %p41
    %p43 = scmp.ne.s32.totalorder %s31, %s32
    %p44 = scmp.eq.s32.totalorder %s15, 1
    %p45 = por %p43, %p44
    %p47 = scmp.ne.s32.totalorder %s32, %s46
    %p48 = scmp.eq.s32.totalorder %s15, 0
    %p49 = por %p47, %p48
    %s50 = ssub.s32 %s17, %s24
    %s51 = ssub.s32 %s16, %s28
    %s52 = sor.u32 %s50, %s51
    %p53 = scmp.eq.s32.totalorder %s52, 0
    %s55 = sadd.s32 %s54, 1
    %s56 = scalar_select %p53, %s54, %s55
    %p59 = pneg %p53
    %p60 = scmp.eq.s32.totalorder %s9, 1
    %p61 = por %p59, %p60
    %p62 = scmp.ne.s32.totalorder %s54, %s57
    %p63 = scmp.eq.s32.totalorder %s9, 0
    %p64 = por %p62, %p63
    %p65 = scmp.ne.s32.totalorder %s54, %s57
    %p66 = scmp.eq.s32.totalorder %s14, 1
    %p67 = por %p65, %p66
    %p68 = scmp.ne.s32.totalorder %s57, %s58
    %p69 = scmp.eq.s32.totalorder %s14, 0
    %p70 = por %p68, %p69
    %p71 = scmp.ne.s32.totalorder %s57, %s58
    %p72 = scmp.eq.s32.totalorder %s15, 1
    %p73 = por %p71, %p72
    %p75 = scmp.ne.s32.totalorder %s58, %s74
    %p76 = scmp.eq.s32.totalorder %s15, 0
    %p77 = por %p75, %p76
    %s78 = ssub.s32 %s16, %s28
    %p79 = scmp.eq.s32.totalorder %s78, 0
    %s81 = sadd.s32 %s80, 1
    %s82 = scalar_select %p79, %s80, %s81
    %p85 = pneg %p79
    %p86 = scmp.eq.s32.totalorder %s9, 1
    %p87 = por %p85, %p86
    %p88 = scmp.ne.s32.totalorder %s80, %s83
    %p89 = scmp.eq.s32.totalorder %s9, 0
    %p90 = por %p88, %p89
    %p91 = scmp.ne.s32.totalorder %s80, %s83
    %p92 = scmp.eq.s32.totalorder %s14, 1
    %p93 = por %p91, %p92
    %p94 = scmp.ne.s32.totalorder %s83, %s84
    %p95 = scmp.eq.s32.totalorder %s14, 0
    %p96 = por %p94, %p95
    %p97 = scmp.ne.s32.totalorder %s83, %s84
    %p98 = scmp.eq.s32.totalorder %s15, 1
    %p99 = por %p97, %p98
    %p101 = scmp.ne.s32.totalorder %s84, %s100
    %p102 = scmp.eq.s32.totalorder %s15, 0
    %p103 = por %p101, %p102
    %s104 = ssub.s32 %s17, %s24
    %s105 = ssub.s32 %s16, %s28
    %s106 = sor.u32 %s104, %s105
    %p107 = scmp.eq.s32.totalorder %s106, 0
    %s109 = sadd.s32 %s108, 1
    %s110 = scalar_select %p107, %s108, %s109
    %p113 = pneg %p107
    %p114 = scmp.eq.s32.totalorder %s9, 1
    %p115 = por %p113, %p114
    %p116 = scmp.ne.s32.totalorder %s108, %s111
    %p117 = scmp.eq.s32.totalorder %s9, 0
    %p118 = por %p116, %p117
    %p119 = scmp.ne.s32.totalorder %s108, %s111
    %p120 = scmp.eq.s32.totalorder %s14, 1
    %p121 = por %p119, %p120
    %p122 = scmp.ne.s32.totalorder %s111, %s112
    %p123 = scmp.eq.s32.totalorder %s14, 0
    %p124 = por %p122, %p123
    %p125 = scmp.ne.s32.totalorder %s111, %s112
    %p126 = scmp.eq.s32.totalorder %s15, 1
    %p127 = por %p125, %p126
    %p129 = scmp.ne.s32.totalorder %s112, %s128
    %p130 = scmp.eq.s32.totalorder %s15, 0
    %p131 = por %p129, %p130
    %p132 = scmp.le.s32.totalorder 1, %s9
    %p133 = scmp.lt.s32.totalorder %s9, 3
    %p134 = pnand %p132, %p133
    %p135 = pneg %p134
    // Predicated region
    $region9: #{_relu_dwconv3x3_impl.1} parent=5 // pred_check
      _
    $region10: #{_relu_dwconv3x3_impl.1} parent=5 // pred_check_branch
      %137 = sbr.rel (%p134) target = $region12
    $region11: #{_relu_dwconv3x3_impl.1} parent=5 // pred_region
      %s138 = ssub.s32 %s9, 1
      // Predicated region
      $region13: #{_relu_dwconv3x3_impl.1} parent=11 // pred_check
        %p139 = pneg %p42
      $region14: #{_relu_dwconv3x3_impl.1} parent=11 // pred_check_branch
        %141 = sbr.rel (%p139) target = $region16
      $region15: #{_relu_dwconv3x3_impl.1} parent=11 // pred_region
        _
      $region16: #{_relu_dwconv3x3_impl.1} parent=11 // pred_fallthru
        _
      // Predicated region
      $region17: #{_relu_dwconv3x3_impl.1} parent=11 // pred_check
        %p142 = pneg %p96
      $region18: #{_relu_dwconv3x3_impl.1} parent=11 // pred_check_branch
        %144 = sbr.rel (%p142) target = $region20
      $region19: #{_relu_dwconv3x3_impl.1} parent=11 // pred_region
        %s145 = smul.u32 6, %s18
        %p146 = scmp.lt.s32.totalorder %s145, 5
        %s147 = scalar_select %p146, %s145, 5
        %s148 = smul.addr %s147, 8
        %s149 = scalar_lea.vmem %s2, %s148
        %s150 = smul.u32 6, %s18
      $region20: #{_relu_dwconv3x3_impl.1} parent=11 // pred_fallthru
        _
    $region12: #{_relu_dwconv3x3_impl.1} parent=5 // pred_fallthru
      _
    %p151 = scmp.lt.s32.totalorder %s9, 2
    // Predicated region
    $region21: #{_relu_dwconv3x3_impl.1} parent=5 // pred_check
      %p152 = pneg %p151
    $region22: #{_relu_dwconv3x3_impl.1} parent=5 // pred_check_branch
      %154 = sbr.rel (%p152) target = $region24
    $region23: #{_relu_dwconv3x3_impl.1} parent=5 // pred_region
      // Predicated region
      $region25: #{_relu_dwconv3x3_impl.1} parent=23 // pred_check
        %p155 = pneg %p64
      $region26: #{_relu_dwconv3x3_impl.1} parent=23 // pred_check_branch
        %157 = sbr.rel (%p155) target = $region28
      $region27: #{_relu_dwconv3x3_impl.1} parent=23 // pred_region
        %s158 = smul.u32 6, %s16
        %p159 = scmp.lt.s32.totalorder %s17, 1
        %s160 = scalar_select %p159, %s17, 1
        %p161 = scmp.lt.s32.totalorder %s158, 5
        %s162 = scalar_select %p161, %s158, 5
        %s163 = smul.addr %s162, 2
        %s164 = smul.addr %s160, 12
        %s165 = sadd.s32 %s163, %s164
        %s166 = smul.addr %s165, 8
        %s167 = scalar_lea.vmem %s1, %s166
        %s168 = smul.u32 6, %s16
      $region28: #{_relu_dwconv3x3_impl.1} parent=23 // pred_fallthru
        _
    $region24: #{_relu_dwconv3x3_impl.1} parent=5 // pred_fallthru
      _
    %p169 = scmp.le.s32.totalorder 1, %s9
    %p170 = scmp.lt.s32.totalorder %s9, 3
    %p171 = pnand %p169, %p170
    %p172 = pneg %p171
    // Predicated region
    $region29: #{_relu_dwconv3x3_impl.1} parent=5 // pred_check
      _
    $region30: #{_relu_dwconv3x3_impl.1} parent=5 // pred_check_branch
      %174 = sbr.rel (%p171) target = $region32
    $region31: #{_relu_dwconv3x3_impl.1} parent=5 // pred_region
      %s175 = ssub.s32 %s9, 1
      %p176 = pneg %p42
      %p177 = pneg %p39
      %s178 = smul.u32 6, %s18
      %p179 = scmp.lt.s32.totalorder %s19, 1
      %s180 = scalar_select %p179, %s19, 1
      %p181 = scmp.lt.s32.totalorder %s178, 5
      %s182 = scalar_select %p181, %s178, 5
      %s183 = smul.addr %s182, 2
      %s184 = smul.addr %s180, 12
      %s185 = sadd.s32 %s183, %s184
      %s186 = smul.addr %s185, 8
      %s187 = scalar_lea.vmem %s1, %s186
      %p188 = pneg %p70
      %p189 = pneg %p67
      %s190 = smul.u32 6, %s18
      %p191 = scmp.lt.s32.totalorder %s190, 5
      %s192 = scalar_select %p191, %s190, 5
      %s193 = smul.addr %s192, 8
      %s194 = scalar_lea.vmem %s2, %s193
      %p195 = pneg %p96
      %p196 = pneg %p93
      %p197 = pneg %p124
      %p198 = pneg %p121
      %s199 = smul.u32 6, %s18
      %p200 = scmp.lt.s32.totalorder %s19, 1
      %s201 = scalar_select %p200, %s19, 1
      %p202 = scmp.lt.s32.totalorder %s199, 5
      %s203 = scalar_select %p202, %s199, 5
      %s204 = smul.addr %s203, 2
      %s205 = smul.addr %s201, 12
      %s206 = sadd.s32 %s204, %s205
      %s207 = smul.addr %s206, 8
      %s208 = scalar_lea.vmem %s3, %s207
      %s209 = smul.u32 6, %s18
      %p210 = scmp.lt.s32.totalorder %s19, 1
      %s211 = scalar_select %p210, %s19, 1
      %p212 = scmp.lt.s32.totalorder %s209, 5
      %s213 = scalar_select %p212, %s209, 5
      %s214 = smul.addr %s213, 2
      %s215 = smul.addr %s211, 12
      %s216 = sadd.s32 %s214, %s215
      %s217 = smul.addr %s216, 8
      %s218 = scalar_lea.vmem %s1, %s217
      %s219 = smul.u32 6, %s18
      %s220 = smul.u32 6, %s18
      %p221 = scmp.lt.s32.totalorder %s220, 5
      %s222 = scalar_select %p221, %s220, 5
      %s223 = smul.addr %s222, 8
      %s224 = scalar_lea.vmem %s2, %s223
      %s225 = smul.u32 6, %s18
      %s226 = smul.u32 6, %s18
      %p227 = scmp.lt.s32.totalorder %s19, 1
      %s228 = scalar_select %p227, %s19, 1
      %p229 = scmp.lt.s32.totalorder %s226, 5
      %s230 = scalar_select %p229, %s226, 5
      %s231 = smul.addr %s230, 2
      %s232 = smul.addr %s228, 12
      %s233 = sadd.s32 %s231, %s232
      %s234 = smul.addr %s233, 8
      %s235 = scalar_lea.vmem %s3, %s234
      %s236 = smul.u32 6, %s18
      %v237 = vld [vmem:[%s218] sm:$0xff]
      %v238 = vld [vmem:[%s218 + $0x8] sm:$0xff]
      %v239 = vld [vmem:[%s218 + $0x10] sm:$0xff]
      %v240 = vld [vmem:[%s218 + $0x18] sm:$0xff]
      %v241 = vld [vmem:[%s218 + $0x20] sm:$0xff]
      %v242 = vld [vmem:[%s218 + $0x28] sm:$0xff]
      %v243 = vld [vmem:[%s218 + $0x30] sm:$0xff]
      %v244 = vld [vmem:[%s218 + $0x38] sm:$0xff]
      %v245 = vld [vmem:[%s218 + $0x40] sm:$0xff]
      %v246 = vld [vmem:[%s218 + $0x48] sm:$0xff]
      %v247 = vld [vmem:[%s218 + $0x50] sm:$0xff]
      %v248 = vld [vmem:[%s218 + $0x58] sm:$0xff]
      %v249 = vmax.f32 %v237, 0.0
      %v250 = vmax.f32 %v238, 0.0
      %v251 = vmax.f32 %v239, 0.0
      %v252 = vmax.f32 %v240, 0.0
      %v253 = vmax.f32 %v241, 0.0
      %v254 = vmax.f32 %v242, 0.0
      %v255 = vmax.f32 %v243, 0.0
      %v256 = vmax.f32 %v244, 0.0
      %v257 = vmax.f32 %v245, 0.0
      %v258 = vmax.f32 %v246, 0.0
      %v259 = vmax.f32 %v247, 0.0
      %v260 = vmax.f32 %v248, 0.0
      %v261 = vld [vmem:[%s224] sm:$0xff]
      %v262 = vld [vmem:[%s224 + $0x8] sm:$0xff]
      %v263 = vld [vmem:[%s224 + $0x10] sm:$0xff]
      %v264 = vld [vmem:[%s224 + $0x18] sm:$0xff]
      %v265 = vld [vmem:[%s224 + $0x20] sm:$0xff]
      %v266 = vld [vmem:[%s224 + $0x28] sm:$0xff]
      %v267 = vld [vmem:[%s0] ss:$4 sm:$0x3]
      %s268 = scalar_lea.vmem %s0, 1
      %v269 = vld [vmem:[%s268] ss:$4 sm:$0x3]
      %s270 = scalar_lea.vmem %s0, 2
      %v271 = vld [vmem:[%s270] ss:$4 sm:$0x3]
      %s272 = scalar_lea.vmem %s0, 3
      %v273 = vld [vmem:[%s272] ss:$4 sm:$0x3]
      %v275 = vlaneseq
      %v276 = vshrl.u32 %v275, 7
      %v277 = vsub.s32 0, %v276
      %v278 = vrot.slane %v269, %v277
      %v279 = vlaneseq
      %v280 = vshrl.u32 %v279, 7
      %v281 = vsub.s32 1, %v280
      %v282 = vrot.slane %v269, %v281
      %v285 = vmul.f32 %v249, %v278
      %v286 = vmul.f32 %v250, %v282
      %v287 = vmul.f32 %v251, %v278
      %v288 = vmul.f32 %v252, %v282
      %v289 = vmul.f32 %v253, %v278
      %v290 = vmul.f32 %v254, %v282
      %v291 = vmul.f32 %v255, %v278
      %v292 = vmul.f32 %v256, %v282
      %v293 = vmul.f32 %v257, %v278
      %v294 = vmul.f32 %v258, %v282
      %v295 = vmul.f32 %v259, %v278
      %v296 = vmul.f32 %v260, %v282
      %303 = vrot.lane.b32.xlu0 %v286, 1
      %v304 = vpop.permute.xlu0 %303
      %305 = vrot.lane.b32.xlu0 %v288, 1
      %v306 = vpop.permute.xlu0 %305
      %307 = vrot.lane.b32.xlu0 %v290, 1
      %v308 = vpop.permute.xlu0 %307
      %309 = vrot.lane.b32.xlu0 %v292, 1
      %v310 = vpop.permute.xlu0 %309
      %311 = vrot.lane.b32.xlu0 %v294, 1
      %v312 = vpop.permute.xlu0 %311
      %313 = vrot.lane.b32.xlu0 %v296, 1
      %v314 = vpop.permute.xlu0 %313
      %327 = vrot.lane.b32.xlu0 %v285, 1
      %v328 = vpop.permute.xlu0 %327
      %329 = vrot.lane.b32.xlu0 %v287, 1
      %v330 = vpop.permute.xlu0 %329
      %331 = vrot.lane.b32.xlu0 %v289, 1
      %v332 = vpop.permute.xlu0 %331
      %333 = vrot.lane.b32.xlu0 %v291, 1
      %v334 = vpop.permute.xlu0 %333
      %335 = vrot.lane.b32.xlu0 %v293, 1
      %v336 = vpop.permute.xlu0 %335
      %337 = vrot.lane.b32.xlu0 %v295, 1
      %v338 = vpop.permute.xlu0 %337
      %vm339 = vcmask 7168
      %v340 = vsel %vm339, %v328, %v304
      %v341 = vsel %vm339, %v330, %v306
      %v342 = vsel %vm339, %v332, %v308
      %v343 = vsel %vm339, %v334, %v310
      %v344 = vsel %vm339, %v336, %v312
      %v345 = vsel %vm339, %v338, %v314
      %v358 = vsel %vm339, %v304, %v328
      %v359 = vsel %vm339, %v306, %v330
      %v360 = vsel %vm339, %v308, %v332
      %v361 = vsel %vm339, %v310, %v334
      %v362 = vsel %vm339, %v312, %v336
      %v363 = vsel %vm339, %v314, %v338
      %v365 = vlaneseq
      %v366 = vshrl.u32 %v365, 7
      %v367 = vsub.s32 0, %v366
      %v368 = vrot.slane %v267, %v367
      %v369 = vlaneseq
      %v370 = vshrl.u32 %v369, 7
      %v371 = vsub.s32 1, %v370
      %v372 = vrot.slane %v267, %v371
      %v375 = vmul.f32 %v249, %v368
      %v376 = vmul.f32 %v250, %v372
      %v377 = vmul.f32 %v251, %v368
      %v378 = vmul.f32 %v252, %v372
      %v379 = vmul.f32 %v253, %v368
      %v380 = vmul.f32 %v254, %v372
      %v381 = vmul.f32 %v255, %v368
      %v382 = vmul.f32 %v256, %v372
      %v383 = vmul.f32 %v257, %v368
      %v384 = vmul.f32 %v258, %v372
      %v385 = vmul.f32 %v259, %v368
      %v386 = vmul.f32 %v260, %v372
      %399 = vrot.lane.b32.xlu0 %v375, 127
      %v400 = vpop.permute.xlu0 %399
      %401 = vrot.lane.b32.xlu0 %v376, 127
      %v402 = vpop.permute.xlu0 %401
      %403 = vrot.lane.b32.xlu0 %v377, 127
      %v404 = vpop.permute.xlu0 %403
      %405 = vrot.lane.b32.xlu0 %v378, 127
      %v406 = vpop.permute.xlu0 %405
      %407 = vrot.lane.b32.xlu0 %v379, 127
      %v408 = vpop.permute.xlu0 %407
      %409 = vrot.lane.b32.xlu0 %v380, 127
      %v410 = vpop.permute.xlu0 %409
      %411 = vrot.lane.b32.xlu0 %v381, 127
      %v412 = vpop.permute.xlu0 %411
      %413 = vrot.lane.b32.xlu0 %v382, 127
      %v414 = vpop.permute.xlu0 %413
      %415 = vrot.lane.b32.xlu0 %v383, 127
      %v416 = vpop.permute.xlu0 %415
      %417 = vrot.lane.b32.xlu0 %v384, 127
      %v418 = vpop.permute.xlu0 %417
      %419 = vrot.lane.b32.xlu0 %v385, 127
      %v420 = vpop.permute.xlu0 %419
      %421 = vrot.lane.b32.xlu0 %v386, 127
      %v422 = vpop.permute.xlu0 %421
      %vm423 = vcmask 1039360
      %v424 = vsel %vm423, %v400, %v402
      %v425 = vsel %vm423, %v404, %v406
      %v426 = vsel %vm423, %v408, %v410
      %v427 = vsel %vm423, %v412, %v414
      %v428 = vsel %vm423, %v416, %v418
      %v429 = vsel %vm423, %v420, %v422
      %v448 = vsel %vm423, %v402, %v400
      %v449 = vsel %vm423, %v406, %v404
      %v450 = vsel %vm423, %v410, %v408
      %v451 = vsel %vm423, %v414, %v412
      %v452 = vsel %vm423, %v418, %v416
      %v453 = vsel %vm423, %v422, %v420
      %455 = vset.pattern.permute.xlu0 3
      %456 = vperm.xlu0 %455, %v261
      %v457 = vpop.permute.xlu0 %456
      %460 = vset.pattern.permute.xlu0 3
      %461 = vperm.xlu0 %460, %v262
      %v462 = vpop.permute.xlu0 %461
      %465 = vset.pattern.permute.xlu0 3
      %466 = vperm.xlu0 %465, %v263
      %v467 = vpop.permute.xlu0 %466
      %470 = vset.pattern.permute.xlu0 3
      %471 = vperm.xlu0 %470, %v264
      %v472 = vpop.permute.xlu0 %471
      %475 = vset.pattern.permute.xlu0 3
      %476 = vperm.xlu0 %475, %v265
      %v477 = vpop.permute.xlu0 %476
      %480 = vset.pattern.permute.xlu0 3
      %481 = vperm.xlu0 %480, %v266
      %v482 = vpop.permute.xlu0 %481
      %v484 = vmul.f32 %v358, %v457
      %v485 = vmul.f32 %v340, %v457
      %v486 = vmul.f32 %v359, %v462
      %v487 = vmul.f32 %v341, %v462
      %v488 = vmul.f32 %v360, %v467
      %v489 = vmul.f32 %v342, %v467
      %v490 = vmul.f32 %v361, %v472
      %v491 = vmul.f32 %v343, %v472
      %v492 = vmul.f32 %v362, %v477
      %v493 = vmul.f32 %v344, %v477
      %v494 = vmul.f32 %v363, %v482
      %v495 = vmul.f32 %v345, %v482
      %496 = vset.pattern.permute.xlu0 4
      %497 = vperm.xlu0 %496, %v261
      %v498 = vpop.permute.xlu0 %497
      %500 = vset.pattern.permute.xlu0 4
      %501 = vperm.xlu0 %500, %v262
      %v502 = vpop.permute.xlu0 %501
      %504 = vset.pattern.permute.xlu0 4
      %505 = vperm.xlu0 %504, %v263
      %v506 = vpop.permute.xlu0 %505
      %508 = vset.pattern.permute.xlu0 4
      %509 = vperm.xlu0 %508, %v264
      %v510 = vpop.permute.xlu0 %509
      %512 = vset.pattern.permute.xlu0 4
      %513 = vperm.xlu0 %512, %v265
      %v514 = vpop.permute.xlu0 %513
      %516 = vset.pattern.permute.xlu0 4
      %517 = vperm.xlu0 %516, %v266
      %v518 = vpop.permute.xlu0 %517
      %v520 = vmul.f32 %v249, %v498
      %v521 = vmul.f32 %v250, %v498
      %v522 = vmul.f32 %v251, %v502
      %v523 = vmul.f32 %v252, %v502
      %v524 = vmul.f32 %v253, %v506
      %v525 = vmul.f32 %v254, %v506
      %v526 = vmul.f32 %v255, %v510
      %v527 = vmul.f32 %v256, %v510
      %v528 = vmul.f32 %v257, %v514
      %v529 = vmul.f32 %v258, %v514
      %v530 = vmul.f32 %v259, %v518
      %v531 = vmul.f32 %v260, %v518
      %v532 = vadd.f32 %v484, %v520
      %v533 = vadd.f32 %v485, %v521
      %v534 = vadd.f32 %v486, %v522
      %v535 = vadd.f32 %v487, %v523
      %v536 = vadd.f32 %v488, %v524
      %v537 = vadd.f32 %v489, %v525
      %v538 = vadd.f32 %v490, %v526
      %v539 = vadd.f32 %v491, %v527
      %v540 = vadd.f32 %v492, %v528
      %v541 = vadd.f32 %v493, %v529
      %v542 = vadd.f32 %v494, %v530
      %v543 = vadd.f32 %v495, %v531
      %544 = vset.pattern.permute.xlu0 5
      %545 = vperm.xlu0 %544, %v261
      %v546 = vpop.permute.xlu0 %545
      %548 = vset.pattern.permute.xlu0 5
      %549 = vperm.xlu0 %548, %v262
      %v550 = vpop.permute.xlu0 %549
      %552 = vset.pattern.permute.xlu0 5
      %553 = vperm.xlu0 %552, %v263
      %v554 = vpop.permute.xlu0 %553
      %556 = vset.pattern.permute.xlu0 5
      %557 = vperm.xlu0 %556, %v264
      %v558 = vpop.permute.xlu0 %557
      %560 = vset.pattern.permute.xlu0 5
      %561 = vperm.xlu0 %560, %v265
      %v562 = vpop.permute.xlu0 %561
      %564 = vset.pattern.permute.xlu0 5
      %565 = vperm.xlu0 %564, %v266
      %v566 = vpop.permute.xlu0 %565
      %v568 = vmul.f32 %v424, %v546
      %v569 = vmul.f32 %v448, %v546
      %v570 = vmul.f32 %v425, %v550
      %v571 = vmul.f32 %v449, %v550
      %v572 = vmul.f32 %v426, %v554
      %v573 = vmul.f32 %v450, %v554
      %v574 = vmul.f32 %v427, %v558
      %v575 = vmul.f32 %v451, %v558
      %v576 = vmul.f32 %v428, %v562
      %v577 = vmul.f32 %v452, %v562
      %v578 = vmul.f32 %v429, %v566
      %v579 = vmul.f32 %v453, %v566
      %v580 = vadd.f32 %v532, %v568
      %v581 = vadd.f32 %v533, %v569
      %v582 = vadd.f32 %v534, %v570
      %v583 = vadd.f32 %v535, %v571
      %v584 = vadd.f32 %v536, %v572
      %v585 = vadd.f32 %v537, %v573
      %v586 = vadd.f32 %v538, %v574
      %v587 = vadd.f32 %v539, %v575
      %v588 = vadd.f32 %v540, %v576
      %v589 = vadd.f32 %v541, %v577
      %v590 = vadd.f32 %v542, %v578
      %v591 = vadd.f32 %v543, %v579
      %592 = vset.pattern.permute.xlu0 0
      %593 = vperm.xlu0 %592, %v261
      %v594 = vpop.permute.xlu0 %593
      %596 = vset.pattern.permute.xlu0 0
      %597 = vperm.xlu0 %596, %v262
      %v598 = vpop.permute.xlu0 %597
      %600 = vset.pattern.permute.xlu0 0
      %601 = vperm.xlu0 %600, %v263
      %v602 = vpop.permute.xlu0 %601
      %604 = vset.pattern.permute.xlu0 0
      %605 = vperm.xlu0 %604, %v264
      %v606 = vpop.permute.xlu0 %605
      %608 = vset.pattern.permute.xlu0 0
      %609 = vperm.xlu0 %608, %v265
      %v610 = vpop.permute.xlu0 %609
      %612 = vset.pattern.permute.xlu0 0
      %613 = vperm.xlu0 %612, %v266
      %v614 = vpop.permute.xlu0 %613
      %v616 = vmul.f32 %v358, %v594
      %v617 = vmul.f32 %v340, %v594
      %v618 = vmul.f32 %v359, %v598
      %v619 = vmul.f32 %v341, %v598
      %v620 = vmul.f32 %v360, %v602
      %v621 = vmul.f32 %v342, %v602
      %v622 = vmul.f32 %v361, %v606
      %v623 = vmul.f32 %v343, %v606
      %v624 = vmul.f32 %v362, %v610
      %v625 = vmul.f32 %v344, %v610
      %v626 = vmul.f32 %v363, %v614
      %v627 = vmul.f32 %v345, %v614
      %628 = vset.pattern.permute.xlu0 1
      %629 = vperm.xlu0 %628, %v261
      %v630 = vpop.permute.xlu0 %629
      %632 = vset.pattern.permute.xlu0 1
      %633 = vperm.xlu0 %632, %v262
      %v634 = vpop.permute.xlu0 %633
      %636 = vset.pattern.permute.xlu0 1
      %637 = vperm.xlu0 %636, %v263
      %v638 = vpop.permute.xlu0 %637
      %640 = vset.pattern.permute.xlu0 1
      %641 = vperm.xlu0 %640, %v264
      %v642 = vpop.permute.xlu0 %641
      %644 = vset.pattern.permute.xlu0 1
      %645 = vperm.xlu0 %644, %v265
      %v646 = vpop.permute.xlu0 %645
      %648 = vset.pattern.permute.xlu0 1
      %649 = vperm.xlu0 %648, %v266
      %v650 = vpop.permute.xlu0 %649
      %v652 = vmul.f32 %v249, %v630
      %v653 = vmul.f32 %v250, %v630
      %v654 = vmul.f32 %v251, %v634
      %v655 = vmul.f32 %v252, %v634
      %v656 = vmul.f32 %v253, %v638
      %v657 = vmul.f32 %v254, %v638
      %v658 = vmul.f32 %v255, %v642
      %v659 = vmul.f32 %v256, %v642
      %v660 = vmul.f32 %v257, %v646
      %v661 = vmul.f32 %v258, %v646
      %v662 = vmul.f32 %v259, %v650
      %v663 = vmul.f32 %v260, %v650
      %v664 = vadd.f32 %v616, %v652
      %v665 = vadd.f32 %v617, %v653
      %v666 = vadd.f32 %v618, %v654
      %v667 = vadd.f32 %v619, %v655
      %v668 = vadd.f32 %v620, %v656
      %v669 = vadd.f32 %v621, %v657
      %v670 = vadd.f32 %v622, %v658
      %v671 = vadd.f32 %v623, %v659
      %v672 = vadd.f32 %v624, %v660
      %v673 = vadd.f32 %v625, %v661
      %v674 = vadd.f32 %v626, %v662
      %v675 = vadd.f32 %v627, %v663
      %676 = vset.pattern.permute.xlu0 2
      %677 = vperm.xlu0 %676, %v261
      %v678 = vpop.permute.xlu0 %677
      %680 = vset.pattern.permute.xlu0 2
      %681 = vperm.xlu0 %680, %v262
      %v682 = vpop.permute.xlu0 %681
      %684 = vset.pattern.permute.xlu0 2
      %685 = vperm.xlu0 %684, %v263
      %v686 = vpop.permute.xlu0 %685
      %688 = vset.pattern.permute.xlu0 2
      %689 = vperm.xlu0 %688, %v264
      %v690 = vpop.permute.xlu0 %689
      %692 = vset.pattern.permute.xlu0 2
      %693 = vperm.xlu0 %692, %v265
      %v694 = vpop.permute.xlu0 %693
      %696 = vset.pattern.permute.xlu0 2
      %697 = vperm.xlu0 %696, %v266
      %v698 = vpop.permute.xlu0 %697
      %v700 = vmul.f32 %v424, %v678
      %v701 = vmul.f32 %v448, %v678
      %v702 = vmul.f32 %v425, %v682
      %v703 = vmul.f32 %v449, %v682
      %v704 = vmul.f32 %v426, %v686
      %v705 = vmul.f32 %v450, %v686
      %v706 = vmul.f32 %v427, %v690
      %v707 = vmul.f32 %v451, %v690
      %v708 = vmul.f32 %v428, %v694
      %v709 = vmul.f32 %v452, %v694
      %v710 = vmul.f32 %v429, %v698
      %v711 = vmul.f32 %v453, %v698
      %v712 = vadd.f32 %v664, %v700
      %v713 = vadd.f32 %v665, %v701
      %v714 = vadd.f32 %v666, %v702
      %v715 = vadd.f32 %v667, %v703
      %v716 = vadd.f32 %v668, %v704
      %v717 = vadd.f32 %v669, %v705
      %v718 = vadd.f32 %v670, %v706
      %v719 = vadd.f32 %v671, %v707
      %v720 = vadd.f32 %v672, %v708
      %v721 = vadd.f32 %v673, %v709
      %v722 = vadd.f32 %v674, %v710
      %v723 = vadd.f32 %v675, %v711
      %730 = vrot.lane.b32.xlu0 %v713, 16
      %v731 = vpop.permute.xlu0 %730
      %732 = vrot.lane.b32.xlu0 %v715, 16
      %v733 = vpop.permute.xlu0 %732
      %734 = vrot.lane.b32.xlu0 %v717, 16
      %v735 = vpop.permute.xlu0 %734
      %736 = vrot.lane.b32.xlu0 %v719, 16
      %v737 = vpop.permute.xlu0 %736
      %738 = vrot.lane.b32.xlu0 %v721, 16
      %v739 = vpop.permute.xlu0 %738
      %740 = vrot.lane.b32.xlu0 %v723, 16
      %v741 = vpop.permute.xlu0 %740
      %754 = vrot.lane.b32.xlu0 %v712, 16
      %v755 = vpop.permute.xlu0 %754
      %756 = vrot.lane.b32.xlu0 %v714, 16
      %v757 = vpop.permute.xlu0 %756
      %758 = vrot.lane.b32.xlu0 %v716, 16
      %v759 = vpop.permute.xlu0 %758
      %760 = vrot.lane.b32.xlu0 %v718, 16
      %v761 = vpop.permute.xlu0 %760
      %762 = vrot.lane.b32.xlu0 %v720, 16
      %v763 = vpop.permute.xlu0 %762
      %764 = vrot.lane.b32.xlu0 %v722, 16
      %v765 = vpop.permute.xlu0 %764
      %vm766 = vcmask 130048
      %v767 = vsel %vm766, %v755, %v731
      %v768 = vsel %vm766, %v757, %v733
      %v769 = vsel %vm766, %v759, %v735
      %v770 = vsel %vm766, %v761, %v737
      %v771 = vsel %vm766, %v763, %v739
      %v772 = vsel %vm766, %v765, %v741
      %v785 = vsel %vm766, %v731, %v755
      %v786 = vsel %vm766, %v733, %v757
      %v787 = vsel %vm766, %v735, %v759
      %v788 = vsel %vm766, %v737, %v761
      %v789 = vsel %vm766, %v739, %v763
      %v790 = vsel %vm766, %v741, %v765
      %v792 = vlaneseq
      %v793 = vshrl.u32 %v792, 7
      %v794 = vsub.s32 0, %v793
      %v795 = vrot.slane %v271, %v794
      %v796 = vlaneseq
      %v797 = vshrl.u32 %v796, 7
      %v798 = vsub.s32 1, %v797
      %v799 = vrot.slane %v271, %v798
      %v802 = vmul.f32 %v785, %v795
      %v803 = vmul.f32 %v767, %v799
      %v804 = vmul.f32 %v786, %v795
      %v805 = vmul.f32 %v768, %v799
      %v806 = vmul.f32 %v787, %v795
      %v807 = vmul.f32 %v769, %v799
      %v808 = vmul.f32 %v788, %v795
      %v809 = vmul.f32 %v770, %v799
      %v810 = vmul.f32 %v789, %v795
      %v811 = vmul.f32 %v771, %v799
      %v812 = vmul.f32 %v790, %v795
      %v813 = vmul.f32 %v772, %v799
      %814 = vset.pattern.permute.xlu0 6
      %815 = vperm.xlu0 %814, %v261
      %v816 = vpop.permute.xlu0 %815
      %818 = vset.pattern.permute.xlu0 6
      %819 = vperm.xlu0 %818, %v262
      %v820 = vpop.permute.xlu0 %819
      %822 = vset.pattern.permute.xlu0 6
      %823 = vperm.xlu0 %822, %v263
      %v824 = vpop.permute.xlu0 %823
      %826 = vset.pattern.permute.xlu0 6
      %827 = vperm.xlu0 %826, %v264
      %v828 = vpop.permute.xlu0 %827
      %830 = vset.pattern.permute.xlu0 6
      %831 = vperm.xlu0 %830, %v265
      %v832 = vpop.permute.xlu0 %831
      %834 = vset.pattern.permute.xlu0 6
      %835 = vperm.xlu0 %834, %v266
      %v836 = vpop.permute.xlu0 %835
      %v838 = vmul.f32 %v358, %v816
      %v839 = vmul.f32 %v340, %v816
      %v840 = vmul.f32 %v359, %v820
      %v841 = vmul.f32 %v341, %v820
      %v842 = vmul.f32 %v360, %v824
      %v843 = vmul.f32 %v342, %v824
      %v844 = vmul.f32 %v361, %v828
      %v845 = vmul.f32 %v343, %v828
      %v846 = vmul.f32 %v362, %v832
      %v847 = vmul.f32 %v344, %v832
      %v848 = vmul.f32 %v363, %v836
      %v849 = vmul.f32 %v345, %v836
      %850 = vset.pattern.permute.xlu0 7
      %851 = vperm.xlu0 %850, %v261
      %v852 = vpop.permute.xlu0 %851
      %854 = vset.pattern.permute.xlu0 7
      %855 = vperm.xlu0 %854, %v262
      %v856 = vpop.permute.xlu0 %855
      %858 = vset.pattern.permute.xlu0 7
      %859 = vperm.xlu0 %858, %v263
      %v860 = vpop.permute.xlu0 %859
      %862 = vset.pattern.permute.xlu0 7
      %863 = vperm.xlu0 %862, %v264
      %v864 = vpop.permute.xlu0 %863
      %866 = vset.pattern.permute.xlu0 7
      %867 = vperm.xlu0 %866, %v265
      %v868 = vpop.permute.xlu0 %867
      %870 = vset.pattern.permute.xlu0 7
      %871 = vperm.xlu0 %870, %v266
      %v872 = vpop.permute.xlu0 %871
      %v874 = vmul.f32 %v249, %v852
      %v875 = vmul.f32 %v250, %v852
      %v876 = vmul.f32 %v251, %v856
      %v877 = vmul.f32 %v252, %v856
      %v878 = vmul.f32 %v253, %v860
      %v879 = vmul.f32 %v254, %v860
      %v880 = vmul.f32 %v255, %v864
      %v881 = vmul.f32 %v256, %v864
      %v882 = vmul.f32 %v257, %v868
      %v883 = vmul.f32 %v258, %v868
      %v884 = vmul.f32 %v259, %v872
      %v885 = vmul.f32 %v260, %v872
      %v886 = vadd.f32 %v838, %v874
      %v887 = vadd.f32 %v839, %v875
      %v888 = vadd.f32 %v840, %v876
      %v889 = vadd.f32 %v841, %v877
      %v890 = vadd.f32 %v842, %v878
      %v891 = vadd.f32 %v843, %v879
      %v892 = vadd.f32 %v844, %v880
      %v893 = vadd.f32 %v845, %v881
      %v894 = vadd.f32 %v846, %v882
      %v895 = vadd.f32 %v847, %v883
      %v896 = vadd.f32 %v848, %v884
      %v897 = vadd.f32 %v849, %v885
      %898 = vset.pattern.permute.xlu0 8
      %899 = vperm.xlu0 %898, %v261
      %v900 = vpop.permute.xlu0 %899
      %902 = vset.pattern.permute.xlu0 8
      %903 = vperm.xlu0 %902, %v262
      %v904 = vpop.permute.xlu0 %903
      %906 = vset.pattern.permute.xlu0 8
      %907 = vperm.xlu0 %906, %v263
      %v908 = vpop.permute.xlu0 %907
      %910 = vset.pattern.permute.xlu0 8
      %911 = vperm.xlu0 %910, %v264
      %v912 = vpop.permute.xlu0 %911
      %914 = vset.pattern.permute.xlu0 8
      %915 = vperm.xlu0 %914, %v265
      %v916 = vpop.permute.xlu0 %915
      %918 = vset.pattern.permute.xlu0 8
      %919 = vperm.xlu0 %918, %v266
      %v920 = vpop.permute.xlu0 %919
      %v922 = vmul.f32 %v424, %v900
      %v923 = vmul.f32 %v448, %v900
      %v924 = vmul.f32 %v425, %v904
      %v925 = vmul.f32 %v449, %v904
      %v926 = vmul.f32 %v426, %v908
      %v927 = vmul.f32 %v450, %v908
      %v928 = vmul.f32 %v427, %v912
      %v929 = vmul.f32 %v451, %v912
      %v930 = vmul.f32 %v428, %v916
      %v931 = vmul.f32 %v452, %v916
      %v932 = vmul.f32 %v429, %v920
      %v933 = vmul.f32 %v453, %v920
      %v934 = vadd.f32 %v886, %v922
      %v935 = vadd.f32 %v887, %v923
      %v936 = vadd.f32 %v888, %v924
      %v937 = vadd.f32 %v889, %v925
      %v938 = vadd.f32 %v890, %v926
      %v939 = vadd.f32 %v891, %v927
      %v940 = vadd.f32 %v892, %v928
      %v941 = vadd.f32 %v893, %v929
      %v942 = vadd.f32 %v894, %v930
      %v943 = vadd.f32 %v895, %v931
      %v944 = vadd.f32 %v896, %v932
      %v945 = vadd.f32 %v897, %v933
      %958 = vrot.lane.b32.xlu0 %v934, 112
      %v959 = vpop.permute.xlu0 %958
      %960 = vrot.lane.b32.xlu0 %v935, 112
      %v961 = vpop.permute.xlu0 %960
      %962 = vrot.lane.b32.xlu0 %v936, 112
      %v963 = vpop.permute.xlu0 %962
      %964 = vrot.lane.b32.xlu0 %v937, 112
      %v965 = vpop.permute.xlu0 %964
      %966 = vrot.lane.b32.xlu0 %v938, 112
      %v967 = vpop.permute.xlu0 %966
      %968 = vrot.lane.b32.xlu0 %v939, 112
      %v969 = vpop.permute.xlu0 %968
      %970 = vrot.lane.b32.xlu0 %v940, 112
      %v971 = vpop.permute.xlu0 %970
      %972 = vrot.lane.b32.xlu0 %v941, 112
      %v973 = vpop.permute.xlu0 %972
      %974 = vrot.lane.b32.xlu0 %v942, 112
      %v975 = vpop.permute.xlu0 %974
      %976 = vrot.lane.b32.xlu0 %v943, 112
      %v977 = vpop.permute.xlu0 %976
      %978 = vrot.lane.b32.xlu0 %v944, 112
      %v979 = vpop.permute.xlu0 %978
      %980 = vrot.lane.b32.xlu0 %v945, 112
      %v981 = vpop.permute.xlu0 %980
      %vm982 = vcmask 916480
      %v983 = vsel %vm982, %v959, %v961
      %v984 = vsel %vm982, %v963, %v965
      %v985 = vsel %vm982, %v967, %v969
      %v986 = vsel %vm982, %v971, %v973
      %v987 = vsel %vm982, %v975, %v977
      %v988 = vsel %vm982, %v979, %v981
      %v1007 = vsel %vm982, %v961, %v959
      %v1008 = vsel %vm982, %v965, %v963
      %v1009 = vsel %vm982, %v969, %v967
      %v1010 = vsel %vm982, %v973, %v971
      %v1011 = vsel %vm982, %v977, %v975
      %v1012 = vsel %vm982, %v981, %v979
      %v1014 = vlaneseq
      %v1015 = vshrl.u32 %v1014, 7
      %v1016 = vsub.s32 0, %v1015
      %v1017 = vrot.slane %v273, %v1016
      %v1018 = vlaneseq
      %v1019 = vshrl.u32 %v1018, 7
      %v1020 = vsub.s32 1, %v1019
      %v1021 = vrot.slane %v273, %v1020
      %v1024 = vmul.f32 %v983, %v1017
      %v1025 = vmul.f32 %v1007, %v1021
      %v1026 = vmul.f32 %v984, %v1017
      %v1027 = vmul.f32 %v1008, %v1021
      %v1028 = vmul.f32 %v985, %v1017
      %v1029 = vmul.f32 %v1009, %v1021
      %v1030 = vmul.f32 %v986, %v1017
      %v1031 = vmul.f32 %v1010, %v1021
      %v1032 = vmul.f32 %v987, %v1017
      %v1033 = vmul.f32 %v1011, %v1021
      %v1034 = vmul.f32 %v988, %v1017
      %v1035 = vmul.f32 %v1012, %v1021
      %v1036 = vadd.f32 %v580, %v802
      %v1037 = vadd.f32 %v581, %v803
      %v1038 = vadd.f32 %v582, %v804
      %v1039 = vadd.f32 %v583, %v805
      %v1040 = vadd.f32 %v584, %v806
      %v1041 = vadd.f32 %v585, %v807
      %v1042 = vadd.f32 %v586, %v808
      %v1043 = vadd.f32 %v587, %v809
      %v1044 = vadd.f32 %v588, %v810
      %v1045 = vadd.f32 %v589, %v811
      %v1046 = vadd.f32 %v590, %v812
      %v1047 = vadd.f32 %v591, %v813
      %v1048 = vadd.f32 %v1036, %v1024
      %v1049 = vadd.f32 %v1037, %v1025
      %v1050 = vadd.f32 %v1038, %v1026
      %v1051 = vadd.f32 %v1039, %v1027
      %v1052 = vadd.f32 %v1040, %v1028
      %v1053 = vadd.f32 %v1041, %v1029
      %v1054 = vadd.f32 %v1042, %v1030
      %v1055 = vadd.f32 %v1043, %v1031
      %v1056 = vadd.f32 %v1044, %v1032
      %v1057 = vadd.f32 %v1045, %v1033
      %v1058 = vadd.f32 %v1046, %v1034
      %v1059 = vadd.f32 %v1047, %v1035
      %1060 = vst [vmem:[%s235] sm:$0xff] %v1048
      %1061 = vst [vmem:[%s235 + $0x8] sm:$0xff] %v1049
      %1062 = vst [vmem:[%s235 + $0x10] sm:$0xff] %v1050
      %1063 = vst [vmem:[%s235 + $0x18] sm:$0xff] %v1051
      %1064 = vst [vmem:[%s235 + $0x20] sm:$0xff] %v1052
      %1065 = vst [vmem:[%s235 + $0x28] sm:$0xff] %v1053
      %1066 = vst [vmem:[%s235 + $0x30] sm:$0xff] %v1054
      %1067 = vst [vmem:[%s235 + $0x38] sm:$0xff] %v1055
      %1068 = vst [vmem:[%s235 + $0x40] sm:$0xff] %v1056
      %1069 = vst [vmem:[%s235 + $0x48] sm:$0xff] %v1057
      %1070 = vst [vmem:[%s235 + $0x50] sm:$0xff] %v1058
      %1071 = vst [vmem:[%s235 + $0x58] sm:$0xff] %v1059
      %s1072 = smul.u32 6, %s18
      %p1073 = scmp.lt.s32.totalorder %s19, 1
      %s1074 = scalar_select %p1073, %s19, 1
      %p1075 = scmp.lt.s32.totalorder %s1072, 5
      %s1076 = scalar_select %p1075, %s1072, 5
      %s1077 = smul.addr %s1076, 2
      %s1078 = smul.addr %s1074, 12
      %s1079 = sadd.s32 %s1077, %s1078
      %s1080 = smul.addr %s1079, 8
      %s1081 = scalar_lea.vmem %s3, %s1080
      // Predicated region
      $region33: #{_relu_dwconv3x3_impl.1} parent=31 // pred_check
        %p1082 = pneg %p121
      $region34: #{_relu_dwconv3x3_impl.1} parent=31 // pred_check_branch
        %1084 = sbr.rel (%p1082) target = $region36
      $region35: #{_relu_dwconv3x3_impl.1} parent=31 // pred_region
        %s1085 = smul.u32 6, %s18
      $region36: #{_relu_dwconv3x3_impl.1} parent=31 // pred_fallthru
        _
    $region32: #{_relu_dwconv3x3_impl.1} parent=5 // pred_fallthru
      _
    %p1086 = scmp.le.s32.totalorder 2, %s9
    // Predicated region
    $region37: #{_relu_dwconv3x3_impl.1} parent=5 // pred_check
      %p1087 = pneg %p1086
    $region38: #{_relu_dwconv3x3_impl.1} parent=5 // pred_check_branch
      %1089 = sbr.rel (%p1087) target = $region40
    $region39: #{_relu_dwconv3x3_impl.1} parent=5 // pred_region
      %s1090 = ssub.s32 %s9, 2
      // Predicated region
      $region41: #{_relu_dwconv3x3_impl.1} parent=39 // pred_check
        %p1091 = pneg %p127
      $region42: #{_relu_dwconv3x3_impl.1} parent=39 // pred_check_branch
        %1093 = sbr.rel (%p1091) target = $region44
      $region43: #{_relu_dwconv3x3_impl.1} parent=39 // pred_region
        %s1094 = smul.u32 6, %s20
        %p1095 = scmp.lt.s32.totalorder %s21, 1
        %s1096 = scalar_select %p1095, %s21, 1
        %p1097 = scmp.lt.s32.totalorder %s1094, 5
        %s1098 = scalar_select %p1097, %s1094, 5
        %s1099 = smul.addr %s1098, 2
        %s1100 = smul.addr %s1096, 12
        %s1101 = sadd.s32 %s1099, %s1100
        %s1102 = smul.addr %s1101, 8
        %s1103 = scalar_lea.vmem %s3, %s1102
      $region44: #{_relu_dwconv3x3_impl.1} parent=39 // pred_fallthru
        _
    $region40: #{_relu_dwconv3x3_impl.1} parent=5 // pred_fallthru
      _
  $region6: #{_relu_dwconv3x3_impl.1} parent=0 // loop_footer
    %s13 = sadd.s32 1, %s9
  $region7: #{_relu_dwconv3x3_impl.1} parent=0 // loop_footer_branch
    %8 = sbr.rel target = $region3
  $region8: #{_relu_dwconv3x3_impl.1} parent=0 // loop_exit
    _

</llo_original>
